<compile_context>
chip_gen: v6e
topology: v6e:2x2x1
jax: 0.10.0
libtpu: 0.0.40
codegen_flags: <defaults>
</compile_context>

<pallas_src>
import functools

import jax
import jax.numpy as jnp
from jax.experimental import pallas as pl
from jax.experimental.pallas import tpu as pltpu


def _bn_train_kernel(x_ref, w_ref, b_ref, y_ref, mean_ref, var_ref, *, eps):
    """Batch-norm hot path for one channel tile.

    x_ref:    (N, C_TILE, HW) input dtype
    w_ref:    (C_TILE, 1) f32   gamma
    b_ref:    (C_TILE, 1) f32   beta
    y_ref:    (N, C_TILE, HW) input dtype (normalized output)
    mean_ref: (C_TILE, 1) f32   batch mean
    var_ref:  (C_TILE, 1) f32   batch variance (biased, as used to normalize)
    """
    x = x_ref[...].astype(jnp.float32)                         # accumulate in f32
    mean = jnp.mean(x, axis=(0, 2), keepdims=True)             # (1, C_TILE, 1)
    diff = x - mean
    var = jnp.mean(diff * diff, axis=(0, 2), keepdims=True)    # biased variance
    inv_std = jax.lax.rsqrt(var + eps)
    gamma = w_ref[...][None]                                   # (1, C_TILE, 1)
    beta = b_ref[...][None]
    y_ref[...] = (diff * (inv_std * gamma) + beta).astype(y_ref.dtype)
    mean_ref[...] = mean[0]                                    # (C_TILE, 1)
    var_ref[...] = var[0]


def _pick_c_tile(N, C, HW, itemsize, target_x_block_bytes=4 << 20):
    """Largest channel tile whose x-block stays under ~4 MiB (multiple of 8 or C)."""
    per_channel = N * HW * itemsize
    if C * per_channel <= target_x_block_bytes or C <= 8:
        return C
    c_tile = int((target_x_block_bytes // per_channel) // 8 * 8)
    c_tile = max(8, c_tile)
    return min(c_tile, C)
    # TODO(synk): if C is tiny but N*H*W is huge, a single-channel block can
    # still exceed VMEM; that case needs HW tiling + a cross-block accumulator.


def batch_norm_train(x_nchw, weight, bias, running_mean, running_var,
                     num_batches_tracked, *, eps=1e-5, momentum=0.1):
    """Forward of _BatchNorm in training mode with track_running_stats=True.

    Returns (y_nchw, new_running_mean, new_running_var, new_num_batches_tracked).
    """
    N, C, H, W = x_nchw.shape
    HW = H * W
    M = N * HW
    in_dtype = x_nchw.dtype

    # Free, contiguous view: NCHW -> (N, C, H*W).  No HBM transpose.
    x3d = x_nchw.reshape(N, C, HW)
    w2d = weight.reshape(C, 1).astype(jnp.float32)
    b2d = bias.reshape(C, 1).astype(jnp.float32)

    itemsize = jnp.dtype(in_dtype).itemsize
    c_tile = _pick_c_tile(N, C, HW, itemsize)
    grid = (pl.cdiv(C, c_tile),)

    # Explicit VMEM budget: x+y blocks, double-buffered, plus slack.  Capped
    # well under v7x's 64 MiB physical VMEM (v5e/v6e have 128 MiB).
    x_block_bytes = N * c_tile * HW * itemsize
    vmem_limit = int(min(max(32 << 20, 5 * x_block_bytes + (2 << 20)), 56 << 20))

    kernel = functools.partial(_bn_train_kernel, eps=float(eps))
    y3d, batch_mean, batch_var = pl.pallas_call(
        kernel,
        out_shape=(
            jax.ShapeDtypeStruct((N, C, HW), in_dtype),
            jax.ShapeDtypeStruct((C, 1), jnp.float32),
            jax.ShapeDtypeStruct((C, 1), jnp.float32),
        ),
        grid=grid,
        in_specs=[
            pl.BlockSpec((N, c_tile, HW), lambda i: (0, i, 0)),
            pl.BlockSpec((c_tile, 1), lambda i: (i, 0)),
            pl.BlockSpec((c_tile, 1), lambda i: (i, 0)),
        ],
        out_specs=(
            pl.BlockSpec((N, c_tile, HW), lambda i: (0, i, 0)),
            pl.BlockSpec((c_tile, 1), lambda i: (i, 0)),
            pl.BlockSpec((c_tile, 1), lambda i: (i, 0)),
        ),
        compiler_params=pltpu.CompilerParams(
            dimension_semantics=("parallel",),
            vmem_limit_bytes=vmem_limit,
        ),
    )(x3d, w2d, b2d)

    y_nchw = y3d.reshape(N, C, H, W)

    # Running-stat update in plain JAX (tiny, per-channel vectors).
    # PyTorch semantics: running_var uses the unbiased batch variance.
    batch_mean = batch_mean.reshape(C)
    batch_var_unbiased = batch_var.reshape(C) * (M / max(M - 1, 1))
    new_rm = ((1.0 - momentum) * running_mean
              + momentum * batch_mean.astype(running_mean.dtype))
    new_rv = ((1.0 - momentum) * running_var
              + momentum * batch_var_unbiased.astype(running_var.dtype))
    new_nbt = num_batches_tracked + 1
    return y_nchw, new_rm, new_rv, new_nbt


if __name__ == "__main__":
    key = jax.random.PRNGKey(0)
    N, C, H, W = 2, 4, 16, 16
    x = jax.random.normal(key, (N, C, H, W), dtype=jnp.float32)

    # Parameters / buffers exactly as _NormBase.reset_parameters():
    #   weight = ones(C), bias = zeros(C),
    #   running_mean = zeros(C), running_var = ones(C), num_batches_tracked = 0
    weight = jnp.ones((C,), dtype=jnp.float32)
    bias = jnp.zeros((C,), dtype=jnp.float32)
    running_mean = jnp.zeros((C,), dtype=jnp.float32)
    running_var = jnp.ones((C,), dtype=jnp.float32)
    num_batches_tracked = jnp.array(0, dtype=jnp.int32)

    eps, momentum = 1e-5, 0.1
    y, new_rm, new_rv, new_nbt = batch_norm_train(
        x, weight, bias, running_mean, running_var, num_batches_tracked,
        eps=eps, momentum=momentum)
    jax.block_until_ready((y, new_rm, new_rv, new_nbt))

    # Pure-JAX reference (training-mode batch norm + running-stat update).
    M = N * H * W
    mean_ref = jnp.mean(x, axis=(0, 2, 3), keepdims=True)
    var_ref = jnp.mean((x - mean_ref) ** 2, axis=(0, 2, 3), keepdims=True)
    y_ref = (x - mean_ref) / jnp.sqrt(var_ref + eps) \
        * weight.reshape(1, C, 1, 1) + bias.reshape(1, C, 1, 1)
    rm_ref = (1 - momentum) * running_mean + momentum * mean_ref.reshape(C)
    rv_ref = (1 - momentum) * running_var \
        + momentum * var_ref.reshape(C) * (M / (M - 1))
    assert jnp.allclose(y, y_ref, atol=1e-4, rtol=1e-4)
    assert jnp.allclose(new_rm, rm_ref, atol=1e-5, rtol=1e-5)
    assert jnp.allclose(new_rv, rv_ref, atol=1e-5, rtol=1e-5)
    assert int(new_nbt) == 1

    # TODO(synk): eval-mode path (module.eval()) would normalize with the
    # running buffers instead of batch statistics; not exercised here since a
    # freshly-constructed module is in training mode.
    print("KERNEL_OK")
</pallas_src>

<mosaic_0001>
module attributes {stable_mosaic.version = 11 : i64} {
  func.func @_bn_train_kernel(%arg0: i32, %arg1: memref<2x4x256xf32, #tpu.memory_space<vmem>>, %arg2: memref<4x1xf32, #tpu.memory_space<vmem>>, %arg3: memref<4x1xf32, #tpu.memory_space<vmem>>, %arg4: memref<2x4x256xf32, #tpu.memory_space<vmem>>, %arg5: memref<4x1xf32, #tpu.memory_space<vmem>>, %arg6: memref<4x1xf32, #tpu.memory_space<vmem>>) attributes {dimension_semantics = [#tpu.dimension_semantics<parallel>], iteration_bounds = array<i64: 1>, scalar_prefetch = 0 : i64, scratch_operands = 0 : i64, tpu.core_type = #tpu.core_type<tc>, window_params = [{transform_indices = @transform_0, window_bounds = array<i64: 2, 4, 256>}, {transform_indices = @transform_1, window_bounds = array<i64: 4, 1>}, {transform_indices = @transform_2, window_bounds = array<i64: 4, 1>}, {transform_indices = @transform_3, window_bounds = array<i64: 2, 4, 256>}, {transform_indices = @transform_4, window_bounds = array<i64: 4, 1>}, {transform_indices = @transform_5, window_bounds = array<i64: 4, 1>}]} {
    %c0 = arith.constant 0 : index
    %c0_0 = arith.constant 0 : index
    %c0_1 = arith.constant 0 : index
    %0 = vector.load %arg1[%c0, %c0_0, %c0_1] : memref<2x4x256xf32, #tpu.memory_space<vmem>>, vector<2x4x256xf32>
    %cst = arith.constant dense<0.000000e+00> : vector<4xf32>
    %1 = vector.multi_reduction <add>, %0, %cst [0, 2] : vector<2x4x256xf32> to vector<4xf32>
    %2 = vector.shape_cast %1 : vector<4xf32> to vector<1x4x1xf32>
    %cst_2 = arith.constant 5.120000e+02 : f32
    %3 = vector.broadcast %cst_2 : f32 to vector<1x4x1xf32>
    %4 = arith.divf %2, %3 : vector<1x4x1xf32>
    %5 = vector.broadcast %4 : vector<1x4x1xf32> to vector<2x4x256xf32>
    %6 = arith.subf %0, %5 : vector<2x4x256xf32>
    %7 = arith.mulf %6, %6 : vector<2x4x256xf32>
    %cst_3 = arith.constant dense<0.000000e+00> : vector<4xf32>
    %8 = vector.multi_reduction <add>, %7, %cst_3 [0, 2] : vector<2x4x256xf32> to vector<4xf32>
    %9 = vector.shape_cast %8 : vector<4xf32> to vector<1x4x1xf32>
    %cst_4 = arith.constant 5.120000e+02 : f32
    %10 = vector.broadcast %cst_4 : f32 to vector<1x4x1xf32>
    %11 = arith.divf %9, %10 : vector<1x4x1xf32>
    %cst_5 = arith.constant 9.99999974E-6 : f32
    %12 = vector.broadcast %cst_5 : f32 to vector<1x4x1xf32>
    %13 = arith.addf %11, %12 : vector<1x4x1xf32>
    %14 = math.rsqrt %13 : vector<1x4x1xf32>
    %c0_6 = arith.constant 0 : index
    %c0_7 = arith.constant 0 : index
    %15 = vector.load %arg2[%c0_6, %c0_7] : memref<4x1xf32, #tpu.memory_space<vmem>>, vector<4x1xf32>
    %16 = vector.shape_cast %15 : vector<4x1xf32> to vector<1x4x1xf32>
    %c0_8 = arith.constant 0 : index
    %c0_9 = arith.constant 0 : index
    %17 = vector.load %arg3[%c0_8, %c0_9] : memref<4x1xf32, #tpu.memory_space<vmem>>, vector<4x1xf32>
    %18 = vector.shape_cast %17 : vector<4x1xf32> to vector<1x4x1xf32>
    %19 = arith.mulf %14, %16 : vector<1x4x1xf32>
    %20 = vector.broadcast %19 : vector<1x4x1xf32> to vector<2x4x256xf32>
    %21 = arith.mulf %6, %20 : vector<2x4x256xf32>
    %22 = vector.broadcast %18 : vector<1x4x1xf32> to vector<2x4x256xf32>
    %23 = arith.addf %21, %22 : vector<2x4x256xf32>
    %c0_10 = arith.constant 0 : index
    %c0_11 = arith.constant 0 : index
    %c0_12 = arith.constant 0 : index
    %24 = vector.load %arg4[%c0_10, %c0_11, %c0_12] : memref<2x4x256xf32, #tpu.memory_space<vmem>>, vector<2x4x256xf32>
    tpu.vector_store %arg4[%c0_10, %c0_11, %c0_12], %23 {strides = array<i32>} : memref<2x4x256xf32, #tpu.memory_space<vmem>>, vector<2x4x256xf32>,
    %25 = vector.shape_cast %4 : vector<1x4x1xf32> to vector<4x1xf32>
    %c0_13 = arith.constant 0 : index
    %c0_14 = arith.constant 0 : index
    %26 = vector.load %arg5[%c0_13, %c0_14] : memref<4x1xf32, #tpu.memory_space<vmem>>, vector<4x1xf32>
    tpu.vector_store %arg5[%c0_13, %c0_14], %25 {strides = array<i32>} : memref<4x1xf32, #tpu.memory_space<vmem>>, vector<4x1xf32>,
    %27 = vector.shape_cast %11 : vector<1x4x1xf32> to vector<4x1xf32>
    %c0_15 = arith.constant 0 : index
    %c0_16 = arith.constant 0 : index
    %28 = vector.load %arg6[%c0_15, %c0_16] : memref<4x1xf32, #tpu.memory_space<vmem>>, vector<4x1xf32>
    tpu.vector_store %arg6[%c0_15, %c0_16], %27 {strides = array<i32>} : memref<4x1xf32, #tpu.memory_space<vmem>>, vector<4x1xf32>,
    return
  }
  func.func @transform_0(%arg0: i32) -> (i32, i32, i32) {
    %c0_i32 = arith.constant 0 : i32
    %c0_i32_0 = arith.constant 0 : i32
    %c0_i32_1 = arith.constant 0 : i32
    return %c0_i32, %arg0, %c0_i32_0 : i32, i32, i32
  }
  func.func @transform_1(%arg0: i32) -> (i32, i32) {
    %c0_i32 = arith.constant 0 : i32
    %c0_i32_0 = arith.constant 0 : i32
    return %arg0, %c0_i32 : i32, i32
  }
  func.func @transform_2(%arg0: i32) -> (i32, i32) {
    %c0_i32 = arith.constant 0 : i32
    %c0_i32_0 = arith.constant 0 : i32
    return %arg0, %c0_i32 : i32, i32
  }
  func.func @transform_3(%arg0: i32) -> (i32, i32, i32) {
    %c0_i32 = arith.constant 0 : i32
    %c0_i32_0 = arith.constant 0 : i32
    %c0_i32_1 = arith.constant 0 : i32
    return %c0_i32, %arg0, %c0_i32_0 : i32, i32, i32
  }
  func.func @transform_4(%arg0: i32) -> (i32, i32) {
    %c0_i32 = arith.constant 0 : i32
    %c0_i32_0 = arith.constant 0 : i32
    return %arg0, %c0_i32 : i32, i32
  }
  func.func @transform_5(%arg0: i32) -> (i32, i32) {
    %c0_i32 = arith.constant 0 : i32
    %c0_i32_0 = arith.constant 0 : i32
    return %arg0, %c0_i32 : i32, i32
  }
}

</mosaic_0001>

<llo_original>
// kernel: tpu_custom_call.1
$region0: #{tpu_custom_call.1}
  #allocation0 [shape = 'u32[]', space=smem, size = 0x4, offset = 0x4, fixed_abs, tag = 'smem constant byte address 0x4 - core index']
  #allocation1 [shape = 'u32[144,128]{1,0:T(1,128)}', space=vmem, size = 0x12000, scoped, tag = 'internal scratch']
  %s0 = inlined_call_operand.hbm [shape: f32[2,4,256], index: 0, kind: input, shape index: {}]
  %s1 = inlined_call_operand.vmem [shape: f32[4,1], index: 1, kind: input, shape index: {}]
  %s2 = inlined_call_operand.vmem [shape: f32[4,1], index: 2, kind: input, shape index: {}]
  %s3 = inlined_call_operand.hbm [shape: f32[2,4,256], index: 3, kind: output, shape index: {0}]
  %s4 = inlined_call_operand.vmem [shape: f32[4,1], index: 4, kind: output, shape index: {1}]
  %s5 = inlined_call_operand.vmem [shape: f32[4,1], index: 5, kind: output, shape index: {2}]
  %6 = xla_tuple %s3, %s4, %s5
  %s7 = sld [smem:[#allocation0]]
  $region42: #{tpu_custom_call.1} parent=0
    _
  %s9 = ssub.s32 1, %s7
  %s10 = scalar_select 0, %s9, %s7
  $region1: #{tpu_custom_call.1} parent=0
    #allocation2 [shape = 'u8[8192]{0}', space=vmem, size = 0x2000, scoped, tag = 'input window, operand 0, single buffered']
    #allocation3 [shape = 's32[1]{0}', space=sflag, size = 0x4, scoped, tag = 'scoped memory for tpu_custom_call.1']
    #allocation4 [shape = 's32[1]{0}', space=sflag, size = 0x4, scoped, tag = 'scoped memory for tpu_custom_call.1']
    #allocation5 [shape = 'u8[8192]{0}', space=vmem, size = 0x2000, scoped, tag = 'output window, operand 0, single buffered']
    %11 = vsyncpa [#allocation3], 0
    %12 = vsyncpa [#allocation4], 0
    // Predicated region
    $region2: #{tpu_custom_call.1} parent=1 // pred_check
      _
    $region3: #{tpu_custom_call.1} parent=1 // pred_check_branch
      %14 = sbr.rel (0) target = $region5
    $region4: #{tpu_custom_call.1} parent=1 // pred_region
      %s16 = ssub.s32 256, 256
      %17 = vsyncadd [#allocation3], %s16
      %s18 = sshll.u32 [#allocation2], 4
      %s19 = int_to_ptr.vmem [resolvable:$true] %s18
      %24 = dma.hbm_to_vmem [thread:$0]  %s0, 256, %s19, [#allocation3], 128, 128, 8
    $region5: #{tpu_custom_call.1} parent=1 // pred_fallthru
      _
    // Predicated region
    $region6: #{tpu_custom_call.1} parent=1 // pred_check
      _
    $region7: #{tpu_custom_call.1} parent=1 // pred_check_branch
      %26 = sbr.rel (0) target = $region9
    $region8: #{tpu_custom_call.1} parent=1 // pred_region
      _
    $region9: #{tpu_custom_call.1} parent=1 // pred_fallthru
      _
    // Predicated region
    $region10: #{tpu_custom_call.1} parent=1 // pred_check
      _
    $region11: #{tpu_custom_call.1} parent=1 // pred_check_branch
      %28 = sbr.rel (0) target = $region13
    $region12: #{tpu_custom_call.1} parent=1 // pred_region
      _
    $region13: #{tpu_custom_call.1} parent=1 // pred_fallthru
      _
    // Predicated region
    $region14: #{tpu_custom_call.1} parent=1 // pred_check
      _
    $region15: #{tpu_custom_call.1} parent=1 // pred_check_branch
      %30 = sbr.rel (0) target = $region17
    $region16: #{tpu_custom_call.1} parent=1 // pred_region
      %31 = dma.done [#allocation3], 256
    $region17: #{tpu_custom_call.1} parent=1 // pred_fallthru
      _
    %v32 = vld [vmem:[#allocation2] sm:$0xff]
    %v33 = vld [vmem:[#allocation2 + $0x8] sm:$0xff]
    %v36 = vcombine.high %v32, %v32
    %v37 = vcombine.high %v33, %v33
    %vm40 = vcmask 1043456
    %v41 = vsel %vm40, %v32, 0.0
    %v42 = vsel %vm40, %v36, 0.0
    %v43 = vadd.f32 %v41, %v42
    %v44 = vsel %vm40, %v33, 0.0
    %v45 = vadd.f32 %v43, %v44
    %v46 = vsel %vm40, %v37, 0.0
    %v47 = vadd.f32 %v45, %v46
    %48 = vadd.xlane.f32.xlu0 %v47
    %v49 = vpop.xlane.xlu0 %48
    %v50 = vrcp.pop 512.0
    %v51 = vmul.f32 %v49, %v50
    %v54 = vunpack.c.l.s4 839922192
    %v55 = vunpack.c.0.s8 %v54
    %v56 = vlaneseq
    %v57 = vshrl.u32 %v56, 7
    %v58 = vsub.s32 %v55, %v57
    %v59 = vrot.slane %v51, %v58
    %v61 = vsub.f32 %v32, %v59
    %v62 = vsub.f32 %v33, %v59
    %v63 = vmul.f32 %v61, %v61
    %v64 = vmul.f32 %v62, %v62
    %v67 = vcombine.high %v63, %v63
    %v68 = vcombine.high %v64, %v64
    %v71 = vsel %vm40, %v63, 0.0
    %v72 = vsel %vm40, %v67, 0.0
    %v73 = vadd.f32 %v71, %v72
    %v74 = vsel %vm40, %v64, 0.0
    %v75 = vadd.f32 %v73, %v74
    %v76 = vsel %vm40, %v68, 0.0
    %v77 = vadd.f32 %v75, %v76
    %78 = vadd.xlane.f32.xlu0 %v77
    %v79 = vpop.xlane.xlu0 %78
    %v80 = vmul.f32 %v79, %v50
    %v81 = vadd.f32 %v80, 1e-05
    %v82 = vrsqrt.pop %v81
    %v83 = vld [vmem:[%s1] sm:$0xf]
    %v84 = vld [vmem:[%s2] sm:$0xf]
    %v85 = vmul.f32 %v82, %v83
    %87 = vset.pattern.permute.xlu0 0
    %88 = vperm.xlu0 %87, %v85
    %v89 = vpop.permute.xlu0 %88
    %v91 = vunpack.c.l.s4 839922192
    %v92 = vunpack.c.0.s8 %v91
    %v93 = vlaneseq
    %v94 = vshrl.u32 %v93, 7
    %v95 = vsub.s32 %v92, %v94
    %v96 = vrot.slane %v89, %v95
    %v98 = vmul.f32 %v61, %v96
    %v99 = vmul.f32 %v62, %v96
    %101 = vset.pattern.permute.xlu0 0
    %102 = vperm.xlu0 %101, %v84
    %v103 = vpop.permute.xlu0 %102
    %v105 = vunpack.c.l.s4 839922192
    %v106 = vunpack.c.0.s8 %v105
    %v107 = vlaneseq
    %v108 = vshrl.u32 %v107, 7
    %v109 = vsub.s32 %v106, %v108
    %v110 = vrot.slane %v103, %v109
    %v112 = vadd.f32 %v98, %v110
    %v113 = vadd.f32 %v99, %v110
    %114 = vst [vmem:[#allocation5] sm:$0xff] %v112
    %115 = vst [vmem:[#allocation5 + $0x8] sm:$0xff] %v113
    %vm116 = vcmask 3072
    %117 = vst.msk [vmem:[%s4] sm:$0xf] %vm116, %v51
    %118 = vst.msk [vmem:[%s5] sm:$0xf] %vm116, %v80
    // Predicated region
    $region18: #{tpu_custom_call.1} parent=1 // pred_check
      _
    $region19: #{tpu_custom_call.1} parent=1 // pred_check_branch
      %120 = sbr.rel (0) target = $region21
    $region20: #{tpu_custom_call.1} parent=1 // pred_region
      %s122 = ssub.s32 256, 256
      %123 = vsyncadd [#allocation4], %s122
      %s124 = sshll.u32 [#allocation5], 4
      %s125 = int_to_ptr.vmem [resolvable:$true] %s124
      %130 = dma.vmem_to_hbm [thread:$0]  %s125, 256, %s3, [#allocation4], 128, 128, 8
    $region21: #{tpu_custom_call.1} parent=1 // pred_fallthru
      _
    // Predicated region
    $region22: #{tpu_custom_call.1} parent=1 // pred_check
      _
    $region23: #{tpu_custom_call.1} parent=1 // pred_check_branch
      %132 = sbr.rel (0) target = $region25
    $region24: #{tpu_custom_call.1} parent=1 // pred_region
      _
    $region25: #{tpu_custom_call.1} parent=1 // pred_fallthru
      _
    // Predicated region
    $region26: #{tpu_custom_call.1} parent=1 // pred_check
      _
    $region27: #{tpu_custom_call.1} parent=1 // pred_check_branch
      %134 = sbr.rel (0) target = $region29
    $region28: #{tpu_custom_call.1} parent=1 // pred_region
      _
    $region29: #{tpu_custom_call.1} parent=1 // pred_fallthru
      _
    // Predicated region
    $region30: #{tpu_custom_call.1} parent=1 // pred_check
      _
    $region31: #{tpu_custom_call.1} parent=1 // pred_check_branch
      %136 = sbr.rel (0) target = $region33
    $region32: #{tpu_custom_call.1} parent=1 // pred_region
      %137 = dma.done [#allocation4], 256
    $region33: #{tpu_custom_call.1} parent=1 // pred_fallthru
      _
    // Predicated region
    $region34: #{tpu_custom_call.1} parent=1 // pred_check
      _
    $region35: #{tpu_custom_call.1} parent=1 // pred_check_branch
      %139 = sbr.rel (0) target = $region37
    $region36: #{tpu_custom_call.1} parent=1 // pred_region
      _
    $region37: #{tpu_custom_call.1} parent=1 // pred_fallthru
      _
    // Predicated region
    $region38: #{tpu_custom_call.1} parent=1 // pred_check
      _
    $region39: #{tpu_custom_call.1} parent=1 // pred_check_branch
      %141 = sbr.rel (0) target = $region41
    $region40: #{tpu_custom_call.1} parent=1 // pred_region
      _
    $region41: #{tpu_custom_call.1} parent=1 // pred_fallthru
      _
    %142 = vsyncpa [#allocation3], 1
    %143 = vsyncpa [#allocation4], 1

</llo_original>
